<compile_context>
chip_gen: v6e
topology: v6e:2x2x1
jax: 0.10.0
libtpu: 0.0.40
codegen_flags: <defaults>
</compile_context>

<pallas_src>
import math

import jax
import jax.numpy as jnp
from jax.experimental import pallas as pl
from jax.experimental.pallas import tpu as pltpu


def _round_up(n, m):
    return ((n + m - 1) // m) * m


def _cdiv(a, b):
    return -(-a // b)


def _sublane_align(dtype):
    # sublane packing: f32 -> 8 rows/vreg, bf16/f16 -> 16, int8/fp8 -> 32
    return 8 * (4 // jnp.dtype(dtype).itemsize)


# --------------------------------------------------------------------------
# Kernel
# --------------------------------------------------------------------------
def _mlp_link_kernel(x_ref, w1_ref, b1_ref, w2_ref, b2_ref, o_ref, h_ref):
    # Hidden activation computed once per row tile (j == 0), cached in VMEM in
    # the compute dtype (single cast), reused across all output-column tiles.
    @pl.when(pl.program_id(1) == 0)
    def _():
        h = jnp.dot(x_ref[...].astype(w1_ref.dtype), w1_ref[...],
                    preferred_element_type=jnp.float32)
        h = jnp.maximum(h + b1_ref[...].astype(jnp.float32), 0.0)
        h_ref[...] = h.astype(h_ref.dtype)

    y = jnp.dot(h_ref[...], w2_ref[...], preferred_element_type=jnp.float32)
    y = y + b2_ref[...].astype(jnp.float32)
    o_ref[...] = y.astype(o_ref.dtype)


# --------------------------------------------------------------------------
# One-time parameter preparation (pad + optional cast), done OUTSIDE the
# per-call wrapper so the weights are never re-padded / re-copied per forward.
# --------------------------------------------------------------------------
def prepare_mlp_link_params(w1, b1, w2, b2, *, compute_dtype=None):
    """w1: [in_f, hid], b1: [hid], w2: [hid, hid], b2: [hid].
    Pads the hidden dim to a 128-lane multiple and casts to compute_dtype."""
    in_f, hid = w1.shape
    hid_p = _round_up(hid, 128)
    dt = jnp.dtype(compute_dtype) if compute_dtype is not None else w1.dtype
    w1p = jnp.pad(w1, ((0, 0), (0, hid_p - hid))).astype(dt)
    b1p = jnp.pad(b1, (0, hid_p - hid)).reshape(1, hid_p).astype(dt)
    w2p = jnp.pad(w2, ((0, hid_p - hid), (0, hid_p - hid))).astype(dt)
    b2p = jnp.pad(b2, (0, hid_p - hid)).reshape(1, hid_p).astype(dt)
    return dict(w1=w1p, b1=b1p, w2=w2p, b2=b2p, in_features=in_f, hidden=hid)


# --------------------------------------------------------------------------
# Generation-aware VMEM budget and tile selection
# --------------------------------------------------------------------------
def _vmem_capacity_bytes():
    try:
        info = pltpu.get_tpu_info()
        cap = getattr(info, "vmem_capacity_bytes", None)
        if cap:
            return int(cap)
    except Exception:
        pass
    return 64 * 1024 * 1024  # conservative (v7x per-TC VMEM)


def _choose_tiles(m, in_f, hid_p, x_dtype, compute_dtype, out_dtype, budget,
                  max_tile_m=None, max_tile_n=None):
    ws = jnp.dtype(compute_dtype).itemsize
    xs = jnp.dtype(x_dtype).itemsize
    ob = jnp.dtype(out_dtype).itemsize
    row_align = max(_sublane_align(x_dtype), _sublane_align(compute_dtype),
                    _sublane_align(out_dtype))

    def usage(tm, tn):
        return (2 * _round_up(in_f, 8) * hid_p * ws        # W1 (double-buffered)
                + 2 * 8 * hid_p * ws                        # b1
                + 2 * tm * _round_up(in_f, 128) * xs        # x tile (2 bufs)
                + 2 * hid_p * tn * ws                        # W2 column slab
                + 2 * 8 * tn * ws                            # b2
                + 2 * tm * tn * ob                           # out tile (2 bufs)
                + tm * hid_p * ws)                           # h scratch

    # Column-tile candidates: multiples of 128 that divide the padded hidden.
    cands = [d for d in range(128, hid_p + 1, 128) if hid_p % d == 0]
    if max_tile_n is not None:
        allowed = [d for d in cands if d <= max(128, max_tile_n)]
        cands = allowed if allowed else cands[:1]
    n_idx = len(cands) - 1
    tile_n = cands[n_idx]

    tile_m_cap = 512 if max_tile_m is None else max(row_align,
                                                    _round_up(max_tile_m, row_align))
    tile_m = min(tile_m_cap, _round_up(max(m, 1), row_align))

    while usage(tile_m, tile_n) > budget:
        if n_idx > 0 and tile_n > 512:          # shrink the W2 slab first
            n_idx -= 1
            tile_n = cands[n_idx]
        elif tile_m > 2 * row_align:
            tile_m = max(row_align, _round_up(tile_m // 2, row_align))
        elif n_idx > 0:
            n_idx -= 1
            tile_n = cands[n_idx]
        else:
            break                                # smallest legal config

    # Balance row tiles (avoid a near-empty padded tile) and give the
    # "parallel" row axis at least two steps for larger m (v7x megacore).
    n_m = max(1, _cdiv(m, tile_m))
    if n_m == 1 and m >= 256:
        n_m = 2
    tile_m = max(row_align, _round_up(_cdiv(m, n_m), row_align))
    return tile_m, tile_n


# --------------------------------------------------------------------------
# Per-call wrapper
# --------------------------------------------------------------------------
def mlp_link(x, params, *, out_dtype=None, max_tile_m=None, max_tile_n=None):
    """Fused Linear -> ReLU -> Linear.  x: [..., in_features].
    params: output of prepare_mlp_link_params().  Returns [..., hidden]."""
    w1, b1, w2, b2 = params["w1"], params["b1"], params["w2"], params["b2"]
    in_f, hid = params["in_features"], params["hidden"]
    hid_p = w1.shape[1]
    assert x.shape[-1] == in_f, (x.shape, in_f)

    lead = x.shape[:-1]
    m = int(math.prod(lead))
    out_dtype = jnp.dtype(out_dtype) if out_dtype is not None else x.dtype
    compute_dtype = w1.dtype

    vmem_cap = _vmem_capacity_bytes()
    vmem_limit = max(32 * 1024 * 1024,
                     min(vmem_cap - 16 * 1024 * 1024, 100 * 1024 * 1024))
    budget = vmem_limit - 2 * 1024 * 1024        # headroom for internal scratch

    tile_m, tile_n = _choose_tiles(m, in_f, hid_p, x.dtype, compute_dtype,
                                   out_dtype, budget, max_tile_m, max_tile_n)

    m_p = _round_up(max(m, 1), tile_m)
    grid = (m_p // tile_m, hid_p // tile_n)

    x2 = x.reshape(m, in_f)
    if m_p != m:
        x2 = jnp.pad(x2, ((0, m_p - m), (0, 0)))   # rows only; features untouched

    out = pl.pallas_call(
        _mlp_link_kernel,
        out_shape=jax.ShapeDtypeStruct((m_p, hid_p), out_dtype),
        grid=grid,
        in_specs=[
            pl.BlockSpec((tile_m, in_f), lambda i, j: (i, 0)),    # x (streamed)
            pl.BlockSpec((in_f, hid_p), lambda i, j: (0, 0)),     # W1 (resident)
            pl.BlockSpec((1, hid_p), lambda i, j: (0, 0)),        # b1 (resident)
            pl.BlockSpec((hid_p, tile_n), lambda i, j: (0, j)),   # W2 column slab
            pl.BlockSpec((1, tile_n), lambda i, j: (0, j)),       # b2 column slab
        ],
        out_specs=pl.BlockSpec((tile_m, tile_n), lambda i, j: (i, j)),
        scratch_shapes=[pltpu.VMEM((tile_m, hid_p), compute_dtype)],  # cached h
        compiler_params=pltpu.CompilerParams(
            dimension_semantics=("parallel", "arbitrary"),
            vmem_limit_bytes=vmem_limit,
        ),
    )(x2, w1, b1, w2, b2)

    return out[:m, :hid].reshape(*lead, hid)


# --------------------------------------------------------------------------
# Parameter init matching mlpLink.__init__ (nn.Linear default init shapes)
# --------------------------------------------------------------------------
def init_mlp_link_params(key, d_model, d_res, p2r=False, dtype=jnp.float32):
    input_size = d_model - d_res if p2r else d_res
    output_size = d_res if p2r else d_model - d_res

    k1, k2, k3, k4 = jax.random.split(key, 4)
    bound1 = 1.0 / (input_size ** 0.5)
    bound2 = 1.0 / (output_size ** 0.5)
    w1_t = jax.random.uniform(k1, (output_size, input_size), dtype,
                              minval=-bound1, maxval=bound1)
    b1 = jax.random.uniform(k2, (output_size,), dtype,
                            minval=-bound1, maxval=bound1)
    w2_t = jax.random.uniform(k3, (output_size, output_size), dtype,
                              minval=-bound2, maxval=bound2)
    b2 = jax.random.uniform(k4, (output_size,), dtype,
                            minval=-bound2, maxval=bound2)
    # transpose PyTorch (out, in) weights to (in, out) for the x @ W layout
    return w1_t.T, b1, w2_t.T, b2, input_size, output_size


def _ref_forward(x, w1, b1, w2, b2):
    hp = jax.lax.Precision.HIGHEST
    h = jnp.maximum(jnp.dot(x, w1, precision=hp) + b1, 0.0)
    return jnp.dot(h, w2, precision=hp) + b2


if __name__ == "__main__":
    key = jax.random.PRNGKey(0)
    kp, kx, kp2, kx2 = jax.random.split(key, 4)

    # --- test 1: shapes implied by mlpLink(d_model=32, d_res=8, p2r=False)
    d_model, d_res, p2r = 32, 8, False          # input_size=8, output_size=24
    w1, b1, w2, b2, in_sz, out_sz = init_mlp_link_params(kp, d_model, d_res, p2r)

    batch, seq = 2, 8
    x = jax.random.normal(kx, (batch, seq, in_sz), dtype=jnp.float32)

    params_f32 = prepare_mlp_link_params(w1, b1, w2, b2)      # prepared once
    y = jax.block_until_ready(mlp_link(x, params_f32))
    y_ref = _ref_forward(x, w1, b1, w2, b2)
    assert y.shape == (batch, seq, out_sz), y.shape
    assert jnp.allclose(y, y_ref, atol=1e-4, rtol=1e-4)

    # bf16 compute path (recommended on v6e/v7x): weights pre-cast once
    params_bf16 = prepare_mlp_link_params(w1, b1, w2, b2,
                                          compute_dtype=jnp.bfloat16)
    y_bf16 = jax.block_until_ready(mlp_link(x, params_bf16))
    assert y_bf16.shape == (batch, seq, out_sz)
    assert jnp.allclose(y_bf16, y_ref, atol=1e-1, rtol=5e-2)

    # --- test 2: small shapes that exercise multi row-tile / multi column-tile
    d_model2, d_res2 = 200, 40                  # input_size=40, output_size=160
    w1b, b1b, w2b, b2b, in2, out2 = init_mlp_link_params(kp2, d_model2, d_res2, False)
    x2 = jax.random.normal(kx2, (2, 24, in2), dtype=jnp.float32)   # 48 rows
    params2 = prepare_mlp_link_params(w1b, b1b, w2b, b2b)
    y2 = jax.block_until_ready(mlp_link(x2, params2, max_tile_m=16, max_tile_n=128))
    y2_ref = _ref_forward(x2, w1b, b1b, w2b, b2b)
    assert y2.shape == (2, 24, out2), y2.shape
    assert jnp.allclose(y2, y2_ref, atol=1e-4, rtol=1e-4)

    print("KERNEL_OK")
</pallas_src>

<mosaic_0001>
module attributes {stable_mosaic.version = 11 : i64} {
  func.func @_mlp_link_kernel(%arg0: i32, %arg1: i32, %arg2: memref<16x8xf32, #tpu.memory_space<vmem>>, %arg3: memref<8x128xf32, #tpu.memory_space<vmem>>, %arg4: memref<1x128xf32, #tpu.memory_space<vmem>>, %arg5: memref<128x128xf32, #tpu.memory_space<vmem>>, %arg6: memref<1x128xf32, #tpu.memory_space<vmem>>, %arg7: memref<16x128xf32, #tpu.memory_space<vmem>>, %arg8: memref<16x128xf32, #tpu.memory_space<vmem>>) attributes {dimension_semantics = [#tpu.dimension_semantics<parallel>, #tpu.dimension_semantics<arbitrary>], iteration_bounds = array<i64: 1, 1>, scalar_prefetch = 0 : i64, scratch_operands = 1 : i64, tpu.core_type = #tpu.core_type<tc>, window_params = [{transform_indices = @transform_0, window_bounds = array<i64: 16, 8>}, {pipeline_mode = #tpu.pipeline_mode<synchronous>, transform_indices = @transform_1, window_bounds = array<i64: 8, 128>}, {pipeline_mode = #tpu.pipeline_mode<synchronous>, transform_indices = @transform_2, window_bounds = array<i64: 1, 128>}, {transform_indices = @transform_3, window_bounds = array<i64: 128, 128>}, {transform_indices = @transform_4, window_bounds = array<i64: 1, 128>}, {transform_indices = @transform_5, window_bounds = array<i64: 16, 128>}]} {
    %c0_i32 = arith.constant 0 : i32
    %0 = arith.cmpi eq, %arg1, %c0_i32 : i32
    %1 = arith.extui %0 : i1 to i32
    %c0_i32_0 = arith.constant 0 : i32
    %2 = arith.cmpi ne, %1, %c0_i32_0 : i32
    scf.if %2 {
      %c0_8 = arith.constant 0 : index
      %c0_9 = arith.constant 0 : index
      %10 = vector.load %arg2[%c0_8, %c0_9] : memref<16x8xf32, #tpu.memory_space<vmem>>, vector<16x8xf32>
      %c0_10 = arith.constant 0 : index
      %c0_11 = arith.constant 0 : index
      %11 = vector.load %arg3[%c0_10, %c0_11] : memref<8x128xf32, #tpu.memory_space<vmem>>, vector<8x128xf32>
      %cst_12 = arith.constant dense<0.000000e+00> : vector<16x128xf32>
      %12 = tpu.matmul %10, %11, %cst_12 {dimension_numbers = #tpu.dot_dimension_numbers<[1], [0], [0], [1], [0, 0, 1, 1], [], []>} : vector<16x8xf32>, vector<8x128xf32>, vector<16x128xf32> -> vector<16x128xf32>
      %c0_13 = arith.constant 0 : index
      %c0_14 = arith.constant 0 : index
      %13 = vector.load %arg4[%c0_13, %c0_14] : memref<1x128xf32, #tpu.memory_space<vmem>>, vector<1x128xf32>
      %14 = vector.broadcast %13 : vector<1x128xf32> to vector<16x128xf32>
      %15 = arith.addf %12, %14 : vector<16x128xf32>
      %cst_15 = arith.constant 0.000000e+00 : f32
      %16 = vector.broadcast %cst_15 : f32 to vector<16x128xf32>
      %17 = arith.maximumf %15, %16 : vector<16x128xf32>
      %c0_16 = arith.constant 0 : index
      %c0_17 = arith.constant 0 : index
      %18 = vector.load %arg8[%c0_16, %c0_17] : memref<16x128xf32, #tpu.memory_space<vmem>>, vector<16x128xf32>
      tpu.vector_store %arg8[%c0_16, %c0_17], %17 {strides = array<i32>} : memref<16x128xf32, #tpu.memory_space<vmem>>, vector<16x128xf32>,
    } else {
    }
    %c0 = arith.constant 0 : index
    %c0_1 = arith.constant 0 : index
    %3 = vector.load %arg8[%c0, %c0_1] : memref<16x128xf32, #tpu.memory_space<vmem>>, vector<16x128xf32>
    %c0_2 = arith.constant 0 : index
    %c0_3 = arith.constant 0 : index
    %4 = vector.load %arg5[%c0_2, %c0_3] : memref<128x128xf32, #tpu.memory_space<vmem>>, vector<128x128xf32>
    %cst = arith.constant dense<0.000000e+00> : vector<16x128xf32>
    %5 = tpu.matmul %3, %4, %cst {dimension_numbers = #tpu.dot_dimension_numbers<[1], [0], [0], [1], [0, 0, 1, 1], [], []>} : vector<16x128xf32>, vector<128x128xf32>, vector<16x128xf32> -> vector<16x128xf32>
    %c0_4 = arith.constant 0 : index
    %c0_5 = arith.constant 0 : index
    %6 = vector.load %arg6[%c0_4, %c0_5] : memref<1x128xf32, #tpu.memory_space<vmem>>, vector<1x128xf32>
    %7 = vector.broadcast %6 : vector<1x128xf32> to vector<16x128xf32>
    %8 = arith.addf %5, %7 : vector<16x128xf32>
    %c0_6 = arith.constant 0 : index
    %c0_7 = arith.constant 0 : index
    %9 = vector.load %arg7[%c0_6, %c0_7] : memref<16x128xf32, #tpu.memory_space<vmem>>, vector<16x128xf32>
    tpu.vector_store %arg7[%c0_6, %c0_7], %8 {strides = array<i32>} : memref<16x128xf32, #tpu.memory_space<vmem>>, vector<16x128xf32>,
    return
  }
  func.func @transform_0(%arg0: i32, %arg1: i32) -> (i32, i32) {
    %c0_i32 = arith.constant 0 : i32
    %c0_i32_0 = arith.constant 0 : i32
    return %arg0, %c0_i32 : i32, i32
  }
  func.func @transform_1(%arg0: i32, %arg1: i32) -> (i32, i32) {
    %c0_i32 = arith.constant 0 : i32
    %c0_i32_0 = arith.constant 0 : i32
    %c0_i32_1 = arith.constant 0 : i32
    return %c0_i32, %c0_i32_0 : i32, i32
  }
  func.func @transform_2(%arg0: i32, %arg1: i32) -> (i32, i32) {
    %c0_i32 = arith.constant 0 : i32
    %c0_i32_0 = arith.constant 0 : i32
    %c0_i32_1 = arith.constant 0 : i32
    return %c0_i32, %c0_i32_0 : i32, i32
  }
  func.func @transform_3(%arg0: i32, %arg1: i32) -> (i32, i32) {
    %c0_i32 = arith.constant 0 : i32
    %c0_i32_0 = arith.constant 0 : i32
    return %c0_i32, %arg1 : i32, i32
  }
  func.func @transform_4(%arg0: i32, %arg1: i32) -> (i32, i32) {
    %c0_i32 = arith.constant 0 : i32
    %c0_i32_0 = arith.constant 0 : i32
    return %c0_i32, %arg1 : i32, i32
  }
  func.func @transform_5(%arg0: i32, %arg1: i32) -> (i32, i32) {
    %c0_i32 = arith.constant 0 : i32
    return %arg0, %arg1 : i32, i32
  }
}

</mosaic_0001>

<llo_original>
// kernel: tpu_custom_call.1
$region0: #{tpu_custom_call.1}
  #allocation0 [shape = 'u32[]', space=smem, size = 0x4, offset = 0x4, fixed_abs, tag = 'smem constant byte address 0x4 - core index']
  #allocation1 [shape = 'u32[144,128]{1,0:T(1,128)}', space=vmem, size = 0x12000, scoped, tag = 'internal scratch']
  #allocation2 [shape = 'f32[16,128]{1,0:T(8,128)}', space=vmem, size = 0x2000, scoped, tag = 'scratch operand']
  %s0 = inlined_call_operand.vmem [shape: f32[16,8], index: 0, kind: input, shape index: {}]
  %s1 = inlined_call_operand.vmem [shape: f32[8,128], index: 1, kind: input, shape index: {}]
  %s2 = inlined_call_operand.vmem [shape: f32[1,128], index: 2, kind: input, shape index: {}]
  %s3 = inlined_call_operand.hbm [shape: f32[128,128], index: 3, kind: input, shape index: {}]
  %s4 = inlined_call_operand.vmem [shape: f32[1,128], index: 4, kind: input, shape index: {}]
  %s5 = inlined_call_operand.hbm [shape: f32[16,128], index: 5, kind: output, shape index: {}]
  %s6 = sld [smem:[#allocation0]]
  $region38: #{tpu_custom_call.1} parent=0
    _
  %s8 = ssub.s32 1, %s6
  %s9 = scalar_select 0, %s8, %s6
  $region1: #{tpu_custom_call.1} parent=0
    #allocation3 [shape = 'u8[65536]{0}', space=vmem, size = 0x10000, scoped, tag = 'input window, operand 3, single buffered']
    #allocation4 [shape = 's32[1]{0}', space=sflag, size = 0x4, scoped, tag = 'scoped memory for tpu_custom_call.1']
    #allocation5 [shape = 's32[1]{0}', space=sflag, size = 0x4, scoped, tag = 'scoped memory for tpu_custom_call.1']
    #allocation6 [shape = 'u8[8192]{0}', space=vmem, size = 0x2000, scoped, tag = 'output window, operand 0, single buffered']
    %10 = vsyncpa [#allocation4], 0
    %11 = vsyncpa [#allocation5], 0
    // Predicated region
    $region2: #{tpu_custom_call.1} parent=1 // pred_check
      _
    $region3: #{tpu_custom_call.1} parent=1 // pred_check_branch
      %13 = sbr.rel (0) target = $region5
    $region4: #{tpu_custom_call.1} parent=1 // pred_region
      _
    $region5: #{tpu_custom_call.1} parent=1 // pred_fallthru
      _
    // Predicated region
    $region6: #{tpu_custom_call.1} parent=1 // pred_check
      _
    $region7: #{tpu_custom_call.1} parent=1 // pred_check_branch
      %15 = sbr.rel (0) target = $region9
    $region8: #{tpu_custom_call.1} parent=1 // pred_region
      _
    $region9: #{tpu_custom_call.1} parent=1 // pred_fallthru
      _
    // Predicated region
    $region10: #{tpu_custom_call.1} parent=1 // pred_check
      _
    $region11: #{tpu_custom_call.1} parent=1 // pred_check_branch
      %17 = sbr.rel (0) target = $region13
    $region12: #{tpu_custom_call.1} parent=1 // pred_region
      _
    $region13: #{tpu_custom_call.1} parent=1 // pred_fallthru
      _
    // Predicated region
    $region14: #{tpu_custom_call.1} parent=1 // pred_check
      _
    $region15: #{tpu_custom_call.1} parent=1 // pred_check_branch
      %19 = sbr.rel (0) target = $region17
    $region16: #{tpu_custom_call.1} parent=1 // pred_region
      %s21 = ssub.s32 2048, 2048
      %22 = vsyncadd [#allocation4], %s21
      %s23 = sshll.u32 [#allocation3], 4
      %s24 = int_to_ptr.vmem [resolvable:$true] %s23
      %29 = dma.hbm_to_vmem [thread:$0]  %s3, 2048, %s24, [#allocation4], 128, 128, 8
    $region17: #{tpu_custom_call.1} parent=1 // pred_fallthru
      _
    // Predicated region
    $region18: #{tpu_custom_call.1} parent=1 // pred_check
      _
    $region19: #{tpu_custom_call.1} parent=1 // pred_check_branch
      %31 = sbr.rel (0) target = $region21
    $region20: #{tpu_custom_call.1} parent=1 // pred_region
      _
    $region21: #{tpu_custom_call.1} parent=1 // pred_fallthru
      _
    // Predicated region
    $region22: #{tpu_custom_call.1} parent=1 // pred_check
      _
    $region23: #{tpu_custom_call.1} parent=1 // pred_check_branch
      %33 = sbr.rel (0) target = $region25
    $region24: #{tpu_custom_call.1} parent=1 // pred_region
      %34 = dma.done [#allocation4], 2048
    $region25: #{tpu_custom_call.1} parent=1 // pred_fallthru
      _
    %p35 = scmp.eq.s32.totalorder 0, 0
    // Predicated region
    $region26: #{tpu_custom_call.1} parent=1 // pred_check
      %p36 = pneg %p35
    $region27: #{tpu_custom_call.1} parent=1 // pred_check_branch
      %38 = sbr.rel (%p36) target = $region29
    $region28: #{tpu_custom_call.1} parent=1 // pred_region
      %v39 = vld [vmem:[%s0] sm:$0xff]
      %v40 = vld [vmem:[%s0 + $0x8] sm:$0xff]
      %v41 = vld [vmem:[%s1] sm:$0xff]
      %v42 = vld [vmem:[%s2] sm:$0x1]
      %v44 = vlaneseq
      %v45 = vshrl.u32 %v44, 7
      %v46 = vsub.s32 0, %v45
      %v47 = vrot.slane %v42, %v46
      %vm49 = vcmask 64512
      %v51 = vsel %vm49, %v39, 0
      %v54 = vsel %vm49, %v40, 0
      %56 = vmatprep.subr.mxu0 0.0
      %57 = vmatpush1.msra.mxu0 0.0
      %58 = vmatprep.subr.mxu0 0.0
      %59 = vmatpush1.msra.mxu0 0.0
      %60 = vmatprep.subr.mxu0 0.0
      %61 = vmatpush1.msra.mxu0 0.0
      %62 = vmatprep.subr.mxu0 0.0
      %63 = vmatpush1.msra.mxu0 0.0
      %64 = vmatprep.subr.mxu0 0.0
      %65 = vmatpush1.msra.mxu0 0.0
      %66 = vmatprep.subr.mxu0 0.0
      %67 = vmatpush1.msra.mxu0 0.0
      %68 = vmatprep.subr.mxu0 0.0
      %69 = vmatpush1.msra.mxu0 0.0
      %70 = vmatprep.subr.mxu0 0.0
      %71 = vmatpush1.msra.mxu0 0.0
      %72 = vmatprep.subr.mxu0 0.0
      %73 = vmatpush1.msra.mxu0 0.0
      %74 = vmatprep.subr.mxu0 0.0
      %75 = vmatpush1.msra.mxu0 0.0
      %76 = vmatprep.subr.mxu0 0.0
      %77 = vmatpush1.msra.mxu0 0.0
      %78 = vmatprep.subr.mxu0 0.0
      %79 = vmatpush1.msra.mxu0 0.0
      %80 = vmatprep.subr.mxu0 0.0
      %81 = vmatpush1.msra.mxu0 0.0
      %82 = vmatprep.subr.mxu0 0.0
      %83 = vmatpush1.msra.mxu0 0.0
      %84 = vmatprep.subr.mxu0 0.0
      %85 = vmatpush1.msra.mxu0 0.0
      %86 = vmatprep.subr.mxu0 0.0
      %87 = vmatpush1.msra.mxu0 %v41
      %88 = vmatprep.subr.mxu0 0.0
      %89 = vmatpush2.msra.mxu0 0.0
      %90 = vmatprep.subr.mxu0 0.0
      %91 = vmatpush2.msra.mxu0 0.0
      %92 = vmatprep.subr.mxu0 0.0
      %93 = vmatpush2.msra.mxu0 0.0
      %94 = vmatprep.subr.mxu0 0.0
      %95 = vmatpush2.msra.mxu0 0.0
      %96 = vmatprep.subr.mxu0 0.0
      %97 = vmatpush2.msra.mxu0 0.0
      %98 = vmatprep.subr.mxu0 0.0
      %99 = vmatpush2.msra.mxu0 0.0
      %100 = vmatprep.subr.mxu0 0.0
      %101 = vmatpush2.msra.mxu0 0.0
      %102 = vmatprep.subr.mxu0 0.0
      %103 = vmatpush2.msra.mxu0 0.0
      %104 = vmatprep.subr.mxu0 0.0
      %105 = vmatpush2.msra.mxu0 0.0
      %106 = vmatprep.subr.mxu0 0.0
      %107 = vmatpush2.msra.mxu0 0.0
      %108 = vmatprep.subr.mxu0 0.0
      %109 = vmatpush2.msra.mxu0 0.0
      %110 = vmatprep.subr.mxu0 0.0
      %111 = vmatpush2.msra.mxu0 0.0
      %112 = vmatprep.subr.mxu0 0.0
      %113 = vmatpush2.msra.mxu0 0.0
      %114 = vmatprep.subr.mxu0 0.0
      %115 = vmatpush2.msra.mxu0 0.0
      %116 = vmatprep.subr.mxu0 0.0
      %117 = vmatpush2.msra.mxu0 0.0
      %118 = vmatprep.subr.mxu0 0.0
      %119 = vmatpush2.msra.mxu0 0.0
      %120 = vmatprep.mubr.f32.mxu0 0.0
      %121 = vmatmul.mubr.f32.gmra.mxu0 %v51
      %v122 = vpop.f32.mrf.mxu0
      %v123 = vadd.f32 %v47, %v122
      %v124 = vpop.f32.mrf.mxu0
      %125 = vmatprep.mubr.f32.mxu0 0.0
      %126 = vmatmul.mubr.f32.gmra.mxu0 %v54
      %v127 = vpop.f32.mrf.mxu0
      %v128 = vadd.f32 %v47, %v127
      %v129 = vpop.f32.mrf.mxu0
      %130 = vdwg.mxu0
      %v131 = vmax.f32 %v123, 0.0
      %v132 = vmax.f32 %v128, 0.0
      %133 = vst [vmem:[#allocation2] sm:$0xff] %v131
      %134 = vst [vmem:[#allocation2 + $0x8] sm:$0xff] %v132
    $region29: #{tpu_custom_call.1} parent=1 // pred_fallthru
      _
    %v135 = vld [vmem:[#allocation2] sm:$0xff]
    %v136 = vld [vmem:[#allocation2 + $0x8] sm:$0xff]
    %v137 = vld [vmem:[#allocation3] sm:$0xff]
    %v138 = vld [vmem:[#allocation3 + $0x8] sm:$0xff]
    %v139 = vld [vmem:[#allocation3 + $0x10] sm:$0xff]
    %v140 = vld [vmem:[#allocation3 + $0x18] sm:$0xff]
    %v141 = vld [vmem:[#allocation3 + $0x20] sm:$0xff]
    %v142 = vld [vmem:[#allocation3 + $0x28] sm:$0xff]
    %v143 = vld [vmem:[#allocation3 + $0x30] sm:$0xff]
    %v144 = vld [vmem:[#allocation3 + $0x38] sm:$0xff]
    %v145 = vld [vmem:[#allocation3 + $0x40] sm:$0xff]
    %v146 = vld [vmem:[#allocation3 + $0x48] sm:$0xff]
    %v147 = vld [vmem:[#allocation3 + $0x50] sm:$0xff]
    %v148 = vld [vmem:[#allocation3 + $0x58] sm:$0xff]
    %v149 = vld [vmem:[#allocation3 + $0x60] sm:$0xff]
    %v150 = vld [vmem:[#allocation3 + $0x68] sm:$0xff]
    %v151 = vld [vmem:[#allocation3 + $0x70] sm:$0xff]
    %v152 = vld [vmem:[#allocation3 + $0x78] sm:$0xff]
    %v153 = vld [vmem:[%s4] sm:$0x1]
    %v155 = vlaneseq
    %v156 = vshrl.u32 %v155, 7
    %v157 = vsub.s32 0, %v156
    %v158 = vrot.slane %v153, %v157
    %160 = vmatprep.subr.mxu0 0.0
    %161 = vmatpush1.msra.mxu0 %v152
    %162 = vmatprep.subr.mxu0 0.0
    %163 = vmatpush1.msra.mxu0 %v151
    %164 = vmatprep.subr.mxu0 0.0
    %165 = vmatpush1.msra.mxu0 %v150
    %166 = vmatprep.subr.mxu0 0.0
    %167 = vmatpush1.msra.mxu0 %v149
    %168 = vmatprep.subr.mxu0 0.0
    %169 = vmatpush1.msra.mxu0 %v148
    %170 = vmatprep.subr.mxu0 0.0
    %171 = vmatpush1.msra.mxu0 %v147
    %172 = vmatprep.subr.mxu0 0.0
    %173 = vmatpush1.msra.mxu0 %v146
    %174 = vmatprep.subr.mxu0 0.0
    %175 = vmatpush1.msra.mxu0 %v145
    %176 = vmatprep.subr.mxu0 0.0
    %177 = vmatpush1.msra.mxu0 %v144
    %178 = vmatprep.subr.mxu0 0.0
    %179 = vmatpush1.msra.mxu0 %v143
    %180 = vmatprep.subr.mxu0 0.0
    %181 = vmatpush1.msra.mxu0 %v142
    %182 = vmatprep.subr.mxu0 0.0
    %183 = vmatpush1.msra.mxu0 %v141
    %184 = vmatprep.subr.mxu0 0.0
    %185 = vmatpush1.msra.mxu0 %v140
    %186 = vmatprep.subr.mxu0 0.0
    %187 = vmatpush1.msra.mxu0 %v139
    %188 = vmatprep.subr.mxu0 0.0
    %189 = vmatpush1.msra.mxu0 %v138
    %190 = vmatprep.subr.mxu0 0.0
    %191 = vmatpush1.msra.mxu0 %v137
    %192 = vmatprep.subr.mxu0 0.0
    %193 = vmatpush2.msra.mxu0 0.0
    %194 = vmatprep.subr.mxu0 0.0
    %195 = vmatpush2.msra.mxu0 0.0
    %196 = vmatprep.subr.mxu0 0.0
    %197 = vmatpush2.msra.mxu0 0.0
    %198 = vmatprep.subr.mxu0 0.0
    %199 = vmatpush2.msra.mxu0 0.0
    %200 = vmatprep.subr.mxu0 0.0
    %201 = vmatpush2.msra.mxu0 0.0
    %202 = vmatprep.subr.mxu0 0.0
    %203 = vmatpush2.msra.mxu0 0.0
    %204 = vmatprep.subr.mxu0 0.0
    %205 = vmatpush2.msra.mxu0 0.0
    %206 = vmatprep.subr.mxu0 0.0
    %207 = vmatpush2.msra.mxu0 0.0
    %208 = vmatprep.subr.mxu0 0.0
    %209 = vmatpush2.msra.mxu0 0.0
    %210 = vmatprep.subr.mxu0 0.0
    %211 = vmatpush2.msra.mxu0 0.0
    %212 = vmatprep.subr.mxu0 0.0
    %213 = vmatpush2.msra.mxu0 0.0
    %214 = vmatprep.subr.mxu0 0.0
    %215 = vmatpush2.msra.mxu0 0.0
    %216 = vmatprep.subr.mxu0 0.0
    %217 = vmatpush2.msra.mxu0 0.0
    %218 = vmatprep.subr.mxu0 0.0
    %219 = vmatpush2.msra.mxu0 0.0
    %220 = vmatprep.subr.mxu0 0.0
    %221 = vmatpush2.msra.mxu0 0.0
    %222 = vmatprep.subr.mxu0 0.0
    %223 = vmatpush2.msra.mxu0 0.0
    %224 = vmatprep.mubr.f32.mxu0 0.0
    %225 = vmatmul.mubr.f32.gmra.mxu0 %v135
    %v226 = vpop.f32.mrf.mxu0
    %v227 = vadd.f32 %v158, %v226
    %v228 = vpop.f32.mrf.mxu0
    %229 = vmatprep.mubr.f32.mxu0 0.0
    %230 = vmatmul.mubr.f32.gmra.mxu0 %v136
    %v231 = vpop.f32.mrf.mxu0
    %v232 = vadd.f32 %v158, %v231
    %v233 = vpop.f32.mrf.mxu0
    %234 = vdwg.mxu0
    %235 = vst [vmem:[#allocation6] sm:$0xff] %v227
    %236 = vst [vmem:[#allocation6 + $0x8] sm:$0xff] %v232
    // Predicated region
    $region30: #{tpu_custom_call.1} parent=1 // pred_check
      _
    $region31: #{tpu_custom_call.1} parent=1 // pred_check_branch
      %238 = sbr.rel (0) target = $region33
    $region32: #{tpu_custom_call.1} parent=1 // pred_region
      %s240 = ssub.s32 256, 256
      %241 = vsyncadd [#allocation5], %s240
      %s242 = sshll.u32 [#allocation6], 4
      %s243 = int_to_ptr.vmem [resolvable:$true] %s242
      %248 = dma.vmem_to_hbm [thread:$0]  %s243, 256, %s5, [#allocation5], 128, 128, 8
    $region33: #{tpu_custom_call.1} parent=1 // pred_fallthru
      _
    // Predicated region
    $region34: #{tpu_custom_call.1} parent=1 // pred_check
      _
    $region35: #{tpu_custom_call.1} parent=1 // pred_check_branch
      %250 = sbr.rel (0) target = $region37
    $region36: #{tpu_custom_call.1} parent=1 // pred_region
      %251 = dma.done [#allocation5], 256
    $region37: #{tpu_custom_call.1} parent=1 // pred_fallthru
      _
    %252 = vsyncpa [#allocation4], 1
    %253 = vsyncpa [#allocation5], 1

</llo_original>
